<compile_context>
chip_gen: v5e
topology: v5e:2x2
jax: 0.10.0
libtpu: 0.0.40
codegen_flags: <defaults>
</compile_context>

<pallas_src>
import functools

import jax
import jax.numpy as jnp
from jax import lax
from jax.experimental import pallas as pl
from jax.experimental.pallas import tpu as pltpu


# ----------------------------- hardware sizing -------------------------------

def _vmem_capacity_bytes():
    """Physical VMEM per core; conservative v7x fallback if the query fails."""
    try:
        cap = getattr(pltpu.get_tpu_info(), "vmem_capacity_bytes", None)
        if cap:
            return int(cap)
    except Exception:
        pass
    return 64 * 1024 * 1024


def _vmem_limit_bytes(need_bytes, vmem_cap):
    """Scoped-VMEM limit: estimated working set + slack, capped below physical."""
    return int(min(0.85 * vmem_cap, max(need_bytes + (8 << 20), 32 << 20)))


def _pick_hw_tile(HW, C, max_block_bytes, itemsize):
    """HW tile: either the full HW (always a legal block) or the largest
    multiple of 128 whose (C, tile) block fits max_block_bytes. Tiles need NOT
    divide HW -- the last (ragged) tile is masked / dropped."""
    if HW <= 128 or HW * C * itemsize <= max_block_bytes:
        return HW
    cap = max(128, (max_block_bytes // (itemsize * C)) // 128 * 128)
    return int(min(cap, pl.cdiv(HW, 128) * 128))


# --------------------------------- kernels -----------------------------------

def _fused_kernel(x_ref, w1_ref, b1_ref, w2_ref, b2_ref, o_ref, *, inv_hw):
    # x_ref/o_ref: (C, HW)   w1/w2: (C, C2)   b1/b2: (1, C2)
    x = x_ref[...].astype(jnp.float32)                                  # (C, HW)
    xbar = jnp.sum(x, axis=-1, keepdims=True) * inv_hw                  # (C, 1)
    # avgpool folded through conv1:  pooled = xbar @ w1 + b1
    pooled = jnp.sum(w1_ref[...] * xbar, axis=0, keepdims=True) + b1_ref[...]
    pooled = pooled - jnp.max(pooled, axis=-1, keepdims=True)
    e = jnp.exp(pooled)
    attn = e / jnp.sum(e, axis=-1, keepdims=True)                       # (1, C2)
    # attn folded through conv2:  v = w2 @ attn^T,  s = b2 . attn
    v = jnp.sum(w2_ref[...] * attn, axis=-1, keepdims=True)             # (C, 1)
    s = jnp.sum(b2_ref[...] * attn, axis=-1, keepdims=True)             # (1, 1)
    logit = jnp.sum(x * v, axis=0, keepdims=True) + s                   # (1, HW)
    o_ref[...] = (x * jax.nn.sigmoid(logit)).astype(o_ref.dtype)


def _colsum_kernel(x_ref, o_ref, *, hwt, hw_total, tiles_per_split, need_mask):
    # x_ref: (C, hwt) tile of x[b];  o_ref: (C, 1) per-(batch, split) partial sum.
    t = pl.program_id(2)

    @pl.when(t == 0)
    def _init():
        o_ref[...] = jnp.zeros_like(o_ref)

    x = x_ref[...].astype(jnp.float32)
    if need_mask:
        # Mask ragged / fully-out-of-range tiles (global column id >= HW).
        tile = pl.program_id(1) * tiles_per_split + t
        col = tile * hwt + lax.broadcasted_iota(jnp.int32, x.shape, 1)
        x = jnp.where(col < hw_total, x, 0.0)
    o_ref[...] += jnp.sum(x, axis=-1, keepdims=True)                    # (C, 1)


def _gate_kernel(x_ref, v_ref, s_ref, o_ref):
    # x_ref/o_ref: (C, hwt)   v_ref: (C, 1)   s_ref: (1, 1)
    x = x_ref[...].astype(jnp.float32)
    logit = jnp.sum(x * v_ref[...], axis=0, keepdims=True) + s_ref[...]  # (1, hwt)
    o_ref[...] = (x * jax.nn.sigmoid(logit)).astype(o_ref.dtype)


# --------------------------------- wrapper ------------------------------------

def spatial_self_attention(x_nchw, w1, b1, w2, b2, *,
                           max_block_bytes=None,
                           allow_fused=True,
                           alias_input=False):
    """SpatialSelfAttention forward.

    x_nchw : (B, C, H, W)
    w1, w2 : (C, C//2) 1x1-conv weights stored as (in_channels, out_channels),
             i.e. the TRANSPOSE of PyTorch Conv2d `weight[:, :, 0, 0]`.
    b1, b2 : (C//2,)
    alias_input : alias x with the output buffer (only if caller no longer
                  needs x; XLA inserts a copy otherwise).
    """
    B, C, H, W = x_nchw.shape
    HW = H * W
    C2 = w1.shape[-1]
    if w1.shape != (C, C2) or w2.shape != (C, C2):
        raise ValueError("w1/w2 must be (in_channels, out_channels) = (C, C//2)")
    if b1.shape != (C2,) or b2.shape != (C2,):
        raise ValueError("b1/b2 must be (out_channels,) = (C//2,)")

    out_dtype = x_nchw.dtype
    x_bcs = x_nchw.reshape(B, C, HW)                # free reshape, no transpose
    w1f = w1.astype(jnp.float32)
    w2f = w2.astype(jnp.float32)
    b1_2d = b1.reshape(1, C2).astype(jnp.float32)
    b2_2d = b2.reshape(1, C2).astype(jnp.float32)

    vmem_cap = _vmem_capacity_bytes()
    x_item = x_bcs.dtype.itemsize
    io_alias = {0: 0} if alias_input else {}

    # ---------------- fused single-read path (x touched HBM<->VMEM once) -----
    # VMEM (double-buffered): 2x in + 2x out slabs + 2x each weight block.
    fused_need = 4 * C * HW * x_item + 4 * C * C2 * 4 + (1 << 20)
    if allow_fused and fused_need <= int(0.70 * vmem_cap):
        x_slab = pl.BlockSpec((None, C, HW), lambda b: (b, 0, 0))
        out = pl.pallas_call(
            functools.partial(_fused_kernel, inv_hw=float(1.0 / HW)),
            out_shape=jax.ShapeDtypeStruct((B, C, HW), out_dtype),
            grid_spec=pltpu.PrefetchScalarGridSpec(
                num_scalar_prefetch=0,
                grid=(B,),
                in_specs=[
                    x_slab,
                    pl.BlockSpec((C, C2), lambda b: (0, 0)),
                    pl.BlockSpec((1, C2), lambda b: (0, 0)),
                    pl.BlockSpec((C, C2), lambda b: (0, 0)),
                    pl.BlockSpec((1, C2), lambda b: (0, 0)),
                ],
                out_specs=x_slab,
            ),
            compiler_params=pltpu.CompilerParams(
                dimension_semantics=("parallel",),
                vmem_limit_bytes=_vmem_limit_bytes(fused_need, vmem_cap)),
            input_output_aliases=io_alias,
        )(x_bcs, w1f, b1_2d, w2f, b2_2d)
        return out.reshape(B, C, H, W)

    # ---------------- two-pass streaming path ---------------------------------
    if max_block_bytes is None:
        # ~vmem/10 per block -> pass-2 double-buffered in+out stays < ~0.4*vmem
        # (v6e/v5e: ~12.8 MiB blocks on 128 MiB; v7x: ~6.4 MiB on 64 MiB).
        max_block_bytes = max(512 << 10, vmem_cap // 10)
    hwt = _pick_hw_tile(HW, C, max_block_bytes, x_item)
    num_tiles = int(pl.cdiv(HW, hwt))

    # ---- Pass 1: per-batch channel sums over HW (ragged tiles masked).
    # Split the HW-tile axis in two parallel chunks when B == 1 so both v7x
    # TensorCores get work; harmless (sequential) on single-TC chips.
    n_split = 2 if (B == 1 and num_tiles >= 2) else 1
    tiles_per_split = int(pl.cdiv(num_tiles, n_split))
    need_mask = (n_split * tiles_per_split * hwt) != HW

    def x_map_p1(b, s, t):
        tile = s * tiles_per_split + t
        if n_split * tiles_per_split != num_tiles:
            tile = jnp.minimum(tile, num_tiles - 1)   # never DMA past the array
        return (b, 0, tile)

    p1_need = 2 * C * hwt * x_item + 2 * C * 4 + (1 << 20)
    colsum = pl.pallas_call(
        functools.partial(_colsum_kernel, hwt=hwt, hw_total=HW,
                          tiles_per_split=tiles_per_split,
                          need_mask=need_mask),
        out_shape=jax.ShapeDtypeStruct((B, n_split, C, 1), jnp.float32),
        grid_spec=pltpu.PrefetchScalarGridSpec(
            num_scalar_prefetch=0,
            grid=(B, n_split, tiles_per_split),        # reduction axis last
            in_specs=[pl.BlockSpec((None, C, hwt), x_map_p1)],
            out_specs=pl.BlockSpec((None, None, C, 1),
                                   lambda b, s, t: (b, s, 0, 0)),
        ),
        compiler_params=pltpu.CompilerParams(
            dimension_semantics=("parallel", "parallel", "arbitrary"),
            vmem_limit_bytes=_vmem_limit_bytes(p1_need, vmem_cap)),
    )(x_bcs)

    # Tiny O(B*C*C2) finalize in plain XLA (no weight blocks held in VMEM for
    # the whole reduction pass): fold avgpool through conv1, softmax, fold
    # attn through conv2.
    xbar = jnp.sum(colsum[..., 0], axis=1) * (1.0 / HW)          # (B, C)
    pooled = xbar @ w1f + b1_2d                                  # (B, C2)
    attn = jax.nn.softmax(pooled, axis=-1)                       # (B, C2)
    v_bc1 = (attn @ w2f.T)[:, :, None]                           # (B, C, 1)
    s_b11 = (attn @ b2.astype(jnp.float32))[:, None, None]       # (B, 1, 1)

    # ---- Pass 2: stream x and apply the sigmoid gate (fully parallel grid).
    # Ragged last tile needs no mask: out-of-bounds columns are dropped on store.
    x_spec = pl.BlockSpec((None, C, hwt), lambda b, t: (b, 0, t))
    p2_need = 4 * C * hwt * x_item + (1 << 20)
    out = pl.pallas_call(
        _gate_kernel,
        out_shape=jax.ShapeDtypeStruct((B, C, HW), out_dtype),
        grid_spec=pltpu.PrefetchScalarGridSpec(
            num_scalar_prefetch=0,
            grid=(B, num_tiles),
            in_specs=[x_spec,
                      pl.BlockSpec((None, C, 1), lambda b, t: (b, 0, 0)),
                      pl.BlockSpec((None, 1, 1), lambda b, t: (b, 0, 0))],
            out_specs=x_spec,
        ),
        compiler_params=pltpu.CompilerParams(
            dimension_semantics=("parallel", "parallel"),
            vmem_limit_bytes=_vmem_limit_bytes(p2_need, vmem_cap)),
        input_output_aliases=io_alias,
    )(x_bcs, v_bc1, s_b11)

    return out.reshape(B, C, H, W)


# -------------------------------- reference -----------------------------------

def _reference(x_nchw, w1, b1, w2, b2):
    """Unfused reference mirroring the PyTorch module."""
    B, C, H, W = x_nchw.shape
    HW = H * W
    xf = x_nchw.reshape(B, C, HW).astype(jnp.float32)
    x1 = jnp.einsum("bcs,co->bos", xf, w1) + b1[None, :, None]   # conv1
    x1 = jnp.mean(x1, axis=-1)                                   # avgpool
    x1 = jax.nn.softmax(x1, axis=-1)[:, None, :]                 # (B, 1, C2)
    x2 = jnp.einsum("bcs,co->bos", xf, w2) + b2[None, :, None]   # conv2
    x3 = jax.nn.sigmoid(jnp.matmul(x1, x2))                      # (B, 1, HW)
    return (xf * x3).reshape(B, C, H, W)


if __name__ == "__main__":
    def _make(key, B, C, H, W):
        C2 = C // 2
        kx, k1, kb1, k2, kb2 = jax.random.split(key, 5)
        x = jax.random.normal(kx, (B, C, H, W), dtype=jnp.float32)
        w1 = jax.random.normal(k1, (C, C2), dtype=jnp.float32) * 0.1
        b1 = jax.random.normal(kb1, (C2,), dtype=jnp.float32) * 0.1
        w2 = jax.random.normal(k2, (C, C2), dtype=jnp.float32) * 0.1
        b2 = jax.random.normal(kb2, (C2,), dtype=jnp.float32) * 0.1
        return x, w1, b1, w2, b2

    key = jax.random.PRNGKey(0)
    k_a, k_b, k_c = jax.random.split(key, 3)

    # A) Fused single-read path (typical small feature map).
    x, w1, b1, w2, b2 = _make(k_a, 2, 4, 16, 16)
    out = jax.block_until_ready(spatial_self_attention(x, w1, b1, w2, b2))
    ref = _reference(x, w1, b1, w2, b2)
    assert out.shape == x.shape
    assert jnp.allclose(out, ref, atol=1e-5, rtol=1e-5), "fused path mismatch"

    # B) Two-pass path, ragged HW tiles (HW = 361, hwt = 128), split + clamped
    #    pass-1 reduction with masking (B = 1 -> dual-chunk reduction).
    x, w1, b1, w2, b2 = _make(k_b, 1, 8, 19, 19)
    out = jax.block_until_ready(
        spatial_self_attention(x, w1, b1, w2, b2,
                               allow_fused=False, max_block_bytes=4 * 1024))
    ref = _reference(x, w1, b1, w2, b2)
    assert jnp.allclose(out, ref, atol=5e-5, rtol=5e-5), "ragged path mismatch"

    # C) Two-pass path, exact tiling (HW = 4096, hwt = 1024), split reduction,
    #    output aliased onto x (reference computed first).
    x, w1, b1, w2, b2 = _make(k_c, 1, 64, 64, 64)
    ref = _reference(x, w1, b1, w2, b2)
    out = jax.block_until_ready(
        spatial_self_attention(x, w1, b1, w2, b2, allow_fused=False,
                               max_block_bytes=256 * 1024, alias_input=True))
    assert jnp.allclose(out, ref, atol=1e-4, rtol=1e-4), "two-pass mismatch"

    print("KERNEL_OK")
</pallas_src>

<mosaic_0001>
module attributes {stable_mosaic.version = 11 : i64} {
  func.func @_fused_kernel(%arg0: i32, %arg1: memref<1x4x256xf32, #tpu.memory_space<vmem>>, %arg2: memref<4x2xf32, #tpu.memory_space<vmem>>, %arg3: memref<1x2xf32, #tpu.memory_space<vmem>>, %arg4: memref<4x2xf32, #tpu.memory_space<vmem>>, %arg5: memref<1x2xf32, #tpu.memory_space<vmem>>, %arg6: memref<1x4x256xf32, #tpu.memory_space<vmem>>) attributes {dimension_semantics = [#tpu.dimension_semantics<parallel>], iteration_bounds = array<i64: 2>, scalar_prefetch = 0 : i64, scratch_operands = 0 : i64, tpu.core_type = #tpu.core_type<tc>, window_params = [{transform_indices = @transform_0, window_bounds = array<i64: 1, 4, 256>}, {pipeline_mode = #tpu.pipeline_mode<synchronous>, transform_indices = @transform_1, window_bounds = array<i64: 4, 2>}, {pipeline_mode = #tpu.pipeline_mode<synchronous>, transform_indices = @transform_2, window_bounds = array<i64: 1, 2>}, {pipeline_mode = #tpu.pipeline_mode<synchronous>, transform_indices = @transform_3, window_bounds = array<i64: 4, 2>}, {pipeline_mode = #tpu.pipeline_mode<synchronous>, transform_indices = @transform_4, window_bounds = array<i64: 1, 2>}, {transform_indices = @transform_5, window_bounds = array<i64: 1, 4, 256>}]} {
    %c0 = arith.constant 0 : index
    %c0_0 = arith.constant 0 : index
    %c0_1 = arith.constant 0 : index
    %0 = vector.load %arg1[%c0, %c0_0, %c0_1] : memref<1x4x256xf32, #tpu.memory_space<vmem>>, vector<1x4x256xf32>
    %1 = vector.shape_cast %0 : vector<1x4x256xf32> to vector<4x256xf32>
    %cst = arith.constant dense<0.000000e+00> : vector<4xf32>
    %2 = vector.multi_reduction <add>, %1, %cst [1] : vector<4x256xf32> to vector<4xf32>
    %3 = vector.shape_cast %2 : vector<4xf32> to vector<4x1xf32>
    %cst_2 = arith.constant 3.906250e-03 : f32
    %4 = vector.broadcast %cst_2 : f32 to vector<4x1xf32>
    %5 = arith.mulf %3, %4 : vector<4x1xf32>
    %c0_3 = arith.constant 0 : index
    %c0_4 = arith.constant 0 : index
    %6 = vector.load %arg2[%c0_3, %c0_4] : memref<4x2xf32, #tpu.memory_space<vmem>>, vector<4x2xf32>
    %7 = vector.broadcast %5 : vector<4x1xf32> to vector<4x2xf32>
    %8 = arith.mulf %6, %7 : vector<4x2xf32>
    %cst_5 = arith.constant dense<0.000000e+00> : vector<2xf32>
    %9 = vector.multi_reduction <add>, %8, %cst_5 [0] : vector<4x2xf32> to vector<2xf32>
    %10 = vector.shape_cast %9 : vector<2xf32> to vector<1x2xf32>
    %c0_6 = arith.constant 0 : index
    %c0_7 = arith.constant 0 : index
    %11 = vector.load %arg3[%c0_6, %c0_7] : memref<1x2xf32, #tpu.memory_space<vmem>>, vector<1x2xf32>
    %12 = arith.addf %10, %11 : vector<1x2xf32>
    %cst_8 = arith.constant dense<0xFF800000> : vector<1xf32>
    %13 = vector.multi_reduction <maximumf>, %12, %cst_8 [1] : vector<1x2xf32> to vector<1xf32>
    %14 = vector.shape_cast %13 : vector<1xf32> to vector<1x1xf32>
    %15 = vector.broadcast %14 : vector<1x1xf32> to vector<1x2xf32>
    %16 = arith.subf %12, %15 : vector<1x2xf32>
    %17 = math.exp %16 : vector<1x2xf32>
    %cst_9 = arith.constant dense<0.000000e+00> : vector<1xf32>
    %18 = vector.multi_reduction <add>, %17, %cst_9 [1] : vector<1x2xf32> to vector<1xf32>
    %19 = vector.shape_cast %18 : vector<1xf32> to vector<1x1xf32>
    %20 = vector.broadcast %19 : vector<1x1xf32> to vector<1x2xf32>
    %21 = arith.divf %17, %20 : vector<1x2xf32>
    %c0_10 = arith.constant 0 : index
    %c0_11 = arith.constant 0 : index
    %22 = vector.load %arg4[%c0_10, %c0_11] : memref<4x2xf32, #tpu.memory_space<vmem>>, vector<4x2xf32>
    %23 = vector.broadcast %21 : vector<1x2xf32> to vector<4x2xf32>
    %24 = arith.mulf %22, %23 : vector<4x2xf32>
    %cst_12 = arith.constant dense<0.000000e+00> : vector<4xf32>
    %25 = vector.multi_reduction <add>, %24, %cst_12 [1] : vector<4x2xf32> to vector<4xf32>
    %26 = vector.shape_cast %25 : vector<4xf32> to vector<4x1xf32>
    %c0_13 = arith.constant 0 : index
    %c0_14 = arith.constant 0 : index
    %27 = vector.load %arg5[%c0_13, %c0_14] : memref<1x2xf32, #tpu.memory_space<vmem>>, vector<1x2xf32>
    %28 = arith.mulf %27, %21 : vector<1x2xf32>
    %cst_15 = arith.constant dense<0.000000e+00> : vector<1xf32>
    %29 = vector.multi_reduction <add>, %28, %cst_15 [1] : vector<1x2xf32> to vector<1xf32>
    %30 = vector.shape_cast %29 : vector<1xf32> to vector<1x1xf32>
    %31 = vector.broadcast %26 : vector<4x1xf32> to vector<4x256xf32>
    %32 = arith.mulf %1, %31 : vector<4x256xf32>
    %cst_16 = arith.constant dense<0.000000e+00> : vector<256xf32>
    %33 = vector.multi_reduction <add>, %32, %cst_16 [0] : vector<4x256xf32> to vector<256xf32>
    %34 = vector.shape_cast %33 : vector<256xf32> to vector<1x256xf32>
    %35 = vector.broadcast %30 : vector<1x1xf32> to vector<1x256xf32>
    %36 = arith.addf %34, %35 : vector<1x256xf32>
    %37 = arith.negf %36 : vector<1x256xf32>
    %38 = math.exp %37 : vector<1x256xf32>
    %cst_17 = arith.constant 1.000000e+00 : f32
    %39 = vector.broadcast %cst_17 : f32 to vector<1x256xf32>
    %40 = arith.addf %39, %38 : vector<1x256xf32>
    %41 = arith.divf %39, %40 : vector<1x256xf32>
    %42 = vector.broadcast %41 : vector<1x256xf32> to vector<4x256xf32>
    %43 = arith.mulf %1, %42 : vector<4x256xf32>
    %c0_18 = arith.constant 0 : index
    %c0_19 = arith.constant 0 : index
    %c0_20 = arith.constant 0 : index
    %44 = vector.load %arg6[%c0_18, %c0_19, %c0_20] : memref<1x4x256xf32, #tpu.memory_space<vmem>>, vector<1x4x256xf32>
    %45 = vector.shape_cast %44 : vector<1x4x256xf32> to vector<4x256xf32>
    %46 = vector.shape_cast %43 : vector<4x256xf32> to vector<1x4x256xf32>
    tpu.vector_store %arg6[%c0_18, %c0_19, %c0_20], %46 {strides = array<i32>} : memref<1x4x256xf32, #tpu.memory_space<vmem>>, vector<1x4x256xf32>,
    return
  }
  func.func @transform_0(%arg0: i32) -> (i32, i32, i32) {
    %c0_i32 = arith.constant 0 : i32
    %c0_i32_0 = arith.constant 0 : i32
    %c0_i32_1 = arith.constant 0 : i32
    return %arg0, %c0_i32, %c0_i32_0 : i32, i32, i32
  }
  func.func @transform_1(%arg0: i32) -> (i32, i32) {
    %c0_i32 = arith.constant 0 : i32
    %c0_i32_0 = arith.constant 0 : i32
    %c0_i32_1 = arith.constant 0 : i32
    return %c0_i32, %c0_i32_0 : i32, i32
  }
  func.func @transform_2(%arg0: i32) -> (i32, i32) {
    %c0_i32 = arith.constant 0 : i32
    %c0_i32_0 = arith.constant 0 : i32
    %c0_i32_1 = arith.constant 0 : i32
    return %c0_i32, %c0_i32_0 : i32, i32
  }
  func.func @transform_3(%arg0: i32) -> (i32, i32) {
    %c0_i32 = arith.constant 0 : i32
    %c0_i32_0 = arith.constant 0 : i32
    %c0_i32_1 = arith.constant 0 : i32
    return %c0_i32, %c0_i32_0 : i32, i32
  }
  func.func @transform_4(%arg0: i32) -> (i32, i32) {
    %c0_i32 = arith.constant 0 : i32
    %c0_i32_0 = arith.constant 0 : i32
    %c0_i32_1 = arith.constant 0 : i32
    return %c0_i32, %c0_i32_0 : i32, i32
  }
  func.func @transform_5(%arg0: i32) -> (i32, i32, i32) {
    %c0_i32 = arith.constant 0 : i32
    %c0_i32_0 = arith.constant 0 : i32
    %c0_i32_1 = arith.constant 0 : i32
    return %arg0, %c0_i32, %c0_i32_0 : i32, i32, i32
  }
}

</mosaic_0001>

<llo_original>
// kernel: tpu_custom_call.1
$region0: #{tpu_custom_call.1}
  #allocation0 [shape = 'u32[]', space=smem, size = 0x4, offset = 0x4, fixed_abs, tag = 'smem constant byte address 0x4 - core index']
  #allocation1 [shape = 'u32[72,128]{1,0:T(1,128)}', space=vmem, size = 0x9000, scoped, tag = 'internal scratch']
  %s0 = inlined_call_operand.hbm [shape: f32[2,4,256], index: 0, kind: input, shape index: {}]
  %s1 = inlined_call_operand.vmem [shape: f32[4,2], index: 1, kind: input, shape index: {}]
  %s2 = inlined_call_operand.vmem [shape: f32[1,2], index: 2, kind: input, shape index: {}]
  %s3 = inlined_call_operand.vmem [shape: f32[4,2], index: 3, kind: input, shape index: {}]
  %s4 = inlined_call_operand.vmem [shape: f32[1,2], index: 4, kind: input, shape index: {}]
  %s5 = inlined_call_operand.hbm [shape: f32[2,4,256], index: 5, kind: output, shape index: {}]
  %s6 = sld [smem:[#allocation0]]
  $region57: #{tpu_custom_call.1} parent=0
    _
  %s8 = ssub.s32 1, %s6
  %s9 = scalar_select 0, %s8, %s6
  $region1: #{tpu_custom_call.1} parent=0
    #allocation2 [shape = 'u8[8192]{0}', space=vmem, size = 0x2000, scoped, tag = 'input window, operand 0']
    #allocation3 [shape = 's32[2]{0}', space=sflag, size = 0x8, scoped, tag = 'scoped memory for tpu_custom_call.1']
    #allocation4 [shape = 's32[2]{0}', space=sflag, size = 0x8, scoped, tag = 'scoped memory for tpu_custom_call.1']
    #allocation5 [shape = 'u8[8192]{0}', space=vmem, size = 0x2000, scoped, tag = 'output window, operand 0']
    %10 = vsyncpa [#allocation3], 0
    %s11 = scalar_lea.sflag [#allocation3], 1
    %12 = vsyncpa %s11, 0
    %13 = vsyncpa [#allocation4], 0
    %s14 = scalar_lea.sflag [#allocation4], 1
    %15 = vsyncpa %s14, 0
    loop: start=0, step=1, limit=4
    $region2: #{tpu_custom_call.1} parent=1 // loop_pre_header
      _
    $region3: #{tpu_custom_call.1} parent=1 // loop_header
      %s17 = sphi 0, %s21
      %p18 = scmp.ge.s32.totalorder %s17, 4
      %s27 = sphi 0, %s29
      %s30 = sphi 0, %s27
      %s31 = sphi 0, %s30
      %s47 = sphi 0, %s31
      %s51 = sphi 0, %s51
      %s53 = sphi 0, %s51
      %s54 = sphi 0, %s53
      %s68 = sphi 0, %s54
      %s72 = sphi 0, %s72
      %s74 = sphi 0, %s72
      %s75 = sphi 0, %s74
      %s89 = sphi 0, %s75
      %s93 = sphi 0, %s93
      %s95 = sphi 0, %s93
      %s96 = sphi 0, %s95
      %s110 = sphi 0, %s96
      %s114 = sphi 0, %s114
      %s116 = sphi 0, %s114
      %s117 = sphi 0, %s116
      %s131 = sphi 0, %s117
      %s137 = sphi 0, %s139
      %s140 = sphi 0, %s137
      %s141 = sphi 0, %s140
      %s157 = sphi 0, %s141
    $region4: #{tpu_custom_call.1} parent=1 // loop_header_branch
      %20 = sbr.rel (%p18) target = $region8
    $region5: #{tpu_custom_call.1} parent=1 // loop_body
      %s22 = ssub.s32 %s17, 1
      %s23 = ssub.s32 %s17, 2
      %s24 = sadd.s32 %s17, 1
      %s25 = ssub.s32 %s17, %s24
      %p26 = scmp.eq.s32.totalorder %s25, 0
      %s28 = sadd.s32 %s27, 1
      %s29 = scalar_select %p26, %s27, %s28
      %p32 = pneg %p26
      %p33 = scmp.eq.s32.totalorder %s17, 1
      %p34 = por %p32, %p33
      %p35 = scmp.ne.s32.totalorder %s27, %s30
      %p36 = scmp.eq.s32.totalorder %s17, 0
      %p37 = por %p35, %p36
      %p38 = scmp.ne.s32.totalorder %s27, %s30
      %p39 = scmp.eq.s32.totalorder %s22, 1
      %p40 = por %p38, %p39
      %p41 = scmp.ne.s32.totalorder %s30, %s31
      %p42 = scmp.eq.s32.totalorder %s22, 0
      %p43 = por %p41, %p42
      %p44 = scmp.ne.s32.totalorder %s30, %s31
      %p45 = scmp.eq.s32.totalorder %s23, 1
      %p46 = por %p44, %p45
      %p48 = scmp.ne.s32.totalorder %s31, %s47
      %p49 = scmp.eq.s32.totalorder %s23, 0
      %p50 = por %p48, %p49
      %s52 = sadd.s32 %s51, 1
      %p55 = scmp.eq.s32.totalorder %s17, 1
      %p56 = scmp.ne.s32.totalorder %s51, %s53
      %p57 = scmp.eq.s32.totalorder %s17, 0
      %p58 = por %p56, %p57
      %p59 = scmp.ne.s32.totalorder %s51, %s53
      %p60 = scmp.eq.s32.totalorder %s22, 1
      %p61 = por %p59, %p60
      %p62 = scmp.ne.s32.totalorder %s53, %s54
      %p63 = scmp.eq.s32.totalorder %s22, 0
      %p64 = por %p62, %p63
      %p65 = scmp.ne.s32.totalorder %s53, %s54
      %p66 = scmp.eq.s32.totalorder %s23, 1
      %p67 = por %p65, %p66
      %p69 = scmp.ne.s32.totalorder %s54, %s68
      %p70 = scmp.eq.s32.totalorder %s23, 0
      %p71 = por %p69, %p70
      %s73 = sadd.s32 %s72, 1
      %p76 = scmp.eq.s32.totalorder %s17, 1
      %p77 = scmp.ne.s32.totalorder %s72, %s74
      %p78 = scmp.eq.s32.totalorder %s17, 0
      %p79 = por %p77, %p78
      %p80 = scmp.ne.s32.totalorder %s72, %s74
      %p81 = scmp.eq.s32.totalorder %s22, 1
      %p82 = por %p80, %p81
      %p83 = scmp.ne.s32.totalorder %s74, %s75
      %p84 = scmp.eq.s32.totalorder %s22, 0
      %p85 = por %p83, %p84
      %p86 = scmp.ne.s32.totalorder %s74, %s75
      %p87 = scmp.eq.s32.totalorder %s23, 1
      %p88 = por %p86, %p87
      %p90 = scmp.ne.s32.totalorder %s75, %s89
      %p91 = scmp.eq.s32.totalorder %s23, 0
      %p92 = por %p90, %p91
      %s94 = sadd.s32 %s93, 1
      %p97 = scmp.eq.s32.totalorder %s17, 1
      %p98 = scmp.ne.s32.totalorder %s93, %s95
      %p99 = scmp.eq.s32.totalorder %s17, 0
      %p100 = por %p98, %p99
      %p101 = scmp.ne.s32.totalorder %s93, %s95
      %p102 = scmp.eq.s32.totalorder %s22, 1
      %p103 = por %p101, %p102
      %p104 = scmp.ne.s32.totalorder %s95, %s96
      %p105 = scmp.eq.s32.totalorder %s22, 0
      %p106 = por %p104, %p105
      %p107 = scmp.ne.s32.totalorder %s95, %s96
      %p108 = scmp.eq.s32.totalorder %s23, 1
      %p109 = por %p107, %p108
      %p111 = scmp.ne.s32.totalorder %s96, %s110
      %p112 = scmp.eq.s32.totalorder %s23, 0
      %p113 = por %p111, %p112
      %s115 = sadd.s32 %s114, 1
      %p118 = scmp.eq.s32.totalorder %s17, 1
      %p119 = scmp.ne.s32.totalorder %s114, %s116
      %p120 = scmp.eq.s32.totalorder %s17, 0
      %p121 = por %p119, %p120
      %p122 = scmp.ne.s32.totalorder %s114, %s116
      %p123 = scmp.eq.s32.totalorder %s22, 1
      %p124 = por %p122, %p123
      %p125 = scmp.ne.s32.totalorder %s116, %s117
      %p126 = scmp.eq.s32.totalorder %s22, 0
      %p127 = por %p125, %p126
      %p128 = scmp.ne.s32.totalorder %s116, %s117
      %p129 = scmp.eq.s32.totalorder %s23, 1
      %p130 = por %p128, %p129
      %p132 = scmp.ne.s32.totalorder %s117, %s131
      %p133 = scmp.eq.s32.totalorder %s23, 0
      %p134 = por %p132, %p133
      %s135 = ssub.s32 %s17, %s24
      %p136 = scmp.eq.s32.totalorder %s135, 0
      %s138 = sadd.s32 %s137, 1
      %s139 = scalar_select %p136, %s137, %s138
      %p142 = pneg %p136
      %p143 = scmp.eq.s32.totalorder %s17, 1
      %p144 = por %p142, %p143
      %p145 = scmp.ne.s32.totalorder %s137, %s140
      %p146 = scmp.eq.s32.totalorder %s17, 0
      %p147 = por %p145, %p146
      %p148 = scmp.ne.s32.totalorder %s137, %s140
      %p149 = scmp.eq.s32.totalorder %s22, 1
      %p150 = por %p148, %p149
      %p151 = scmp.ne.s32.totalorder %s140, %s141
      %p152 = scmp.eq.s32.totalorder %s22, 0
      %p153 = por %p151, %p152
      %p154 = scmp.ne.s32.totalorder %s140, %s141
      %p155 = scmp.eq.s32.totalorder %s23, 1
      %p156 = por %p154, %p155
      %p158 = scmp.ne.s32.totalorder %s141, %s157
      %p159 = scmp.eq.s32.totalorder %s23, 0
      %p160 = por %p158, %p159
      %p161 = scmp.le.s32.totalorder 1, %s17
      %p162 = scmp.lt.s32.totalorder %s17, 3
      %p163 = pnand %p161, %p162
      %p164 = pneg %p163
      // Predicated region
      $region9: #{tpu_custom_call.1} parent=5 // pred_check
        _
      $region10: #{tpu_custom_call.1} parent=5 // pred_check_branch
        %166 = sbr.rel (%p163) target = $region12
      $region11: #{tpu_custom_call.1} parent=5 // pred_region
        %s167 = ssub.s32 %s17, 1
        // Predicated region
        $region13: #{tpu_custom_call.1} parent=11 // pred_check
          %p168 = pneg %p64
        $region14: #{tpu_custom_call.1} parent=11 // pred_check_branch
          %170 = sbr.rel (%p168) target = $region16
        $region15: #{tpu_custom_call.1} parent=11 // pred_region
          _
        $region16: #{tpu_custom_call.1} parent=11 // pred_fallthru
          _
        // Predicated region
        $region17: #{tpu_custom_call.1} parent=11 // pred_check
          %p171 = pneg %p85
        $region18: #{tpu_custom_call.1} parent=11 // pred_check_branch
          %173 = sbr.rel (%p171) target = $region20
        $region19: #{tpu_custom_call.1} parent=11 // pred_region
          _
        $region20: #{tpu_custom_call.1} parent=11 // pred_fallthru
          _
        // Predicated region
        $region21: #{tpu_custom_call.1} parent=11 // pred_check
          %p174 = pneg %p106
        $region22: #{tpu_custom_call.1} parent=11 // pred_check_branch
          %176 = sbr.rel (%p174) target = $region24
        $region23: #{tpu_custom_call.1} parent=11 // pred_region
          _
        $region24: #{tpu_custom_call.1} parent=11 // pred_fallthru
          _
        // Predicated region
        $region25: #{tpu_custom_call.1} parent=11 // pred_check
          %p177 = pneg %p127
        $region26: #{tpu_custom_call.1} parent=11 // pred_check_branch
          %179 = sbr.rel (%p177) target = $region28
        $region27: #{tpu_custom_call.1} parent=11 // pred_region
          _
        $region28: #{tpu_custom_call.1} parent=11 // pred_fallthru
          _
      $region12: #{tpu_custom_call.1} parent=5 // pred_fallthru
        _
      %p180 = scmp.lt.s32.totalorder %s17, 2
      // Predicated region
      $region29: #{tpu_custom_call.1} parent=5 // pred_check
        %p181 = pneg %p180
      $region30: #{tpu_custom_call.1} parent=5 // pred_check_branch
        %183 = sbr.rel (%p181) target = $region32
      $region31: #{tpu_custom_call.1} parent=5 // pred_region
        // Predicated region
        $region33: #{tpu_custom_call.1} parent=31 // pred_check
          %p184 = pneg %p37
        $region34: #{tpu_custom_call.1} parent=31 // pred_check_branch
          %186 = sbr.rel (%p184) target = $region36
        $region35: #{tpu_custom_call.1} parent=31 // pred_region
          %s187 = sand.u32 %s27, 1
          %s188 = scalar_lea.sflag [#allocation3], %s187
          %s189 = sand.u32 %s27, 1
          %s190 = smul.addr %s189, 8
          %s191 = scalar_lea.vmem [#allocation2], %s190
          %193 = vsyncadd %s188, 0
          %s194 = smul.addr %s17, 2
          %s195 = smul.addr %s194, 4
          %s196 = scalar_lea.hbm %s0, %s195
          %s198 = sshll.u32 %s196, 4
          %s199 = int_to_ptr.hbm [resolvable:$true] %s198
          %s200 = sshll.u32 %s191, 4
          %s201 = int_to_ptr.vmem [resolvable:$true] %s200
          %203 = dma.hbm_to_vmem [thread:$0]  %s199, 128, %s201, %s188
        $region36: #{tpu_custom_call.1} parent=31 // pred_fallthru
          _
      $region32: #{tpu_custom_call.1} parent=5 // pred_fallthru
        _
      %p204 = scmp.le.s32.totalorder 1, %s17
      %p205 = scmp.lt.s32.totalorder %s17, 3
      %p206 = pnand %p204, %p205
      %p207 = pneg %p206
      // Predicated region
      $region37: #{tpu_custom_call.1} parent=5 // pred_check
        _
      $region38: #{tpu_custom_call.1} parent=5 // pred_check_branch
        %209 = sbr.rel (%p206) target = $region40
      $region39: #{tpu_custom_call.1} parent=5 // pred_region
        %s210 = ssub.s32 %s17, 1
        %s211 = sand.u32 %s30, 1
        %s212 = scalar_lea.sflag [#allocation3], %s211
        %s213 = sand.u32 %s30, 1
        %s214 = smul.addr %s213, 8
        %s215 = scalar_lea.vmem [#allocation2], %s214
        // Predicated region
        $region41: #{tpu_custom_call.1} parent=39 // pred_check
          %p216 = pneg %p43
        $region42: #{tpu_custom_call.1} parent=39 // pred_check_branch
          %218 = sbr.rel (%p216) target = $region44
        $region43: #{tpu_custom_call.1} parent=39 // pred_region
          %220 = dma.done %s212, 128
        $region44: #{tpu_custom_call.1} parent=39 // pred_fallthru
          _
        %s221 = sand.u32 %s30, 1
        %s222 = scalar_lea.sflag [#allocation3], %s221
        %s223 = sand.u32 %s30, 1
        %s224 = smul.addr %s223, 8
        %s225 = scalar_lea.vmem [#allocation2], %s224
        %p226 = pneg %p43
        %p227 = pneg %p40
        %p228 = pneg %p64
        %p229 = pneg %p61
        %p230 = pneg %p85
        %p231 = pneg %p82
        %p232 = pneg %p106
        %p233 = pneg %p103
        %p234 = pneg %p127
        %p235 = pneg %p124
        %p236 = pneg %p153
        %p237 = pneg %p150
        %s238 = sand.u32 %s140, 1
        %s239 = scalar_lea.sflag [#allocation4], %s238
        %s240 = sand.u32 %s140, 1
        %s241 = smul.addr %s240, 8
        %s242 = scalar_lea.vmem [#allocation5], %s241
        %v243 = vld [vmem:[%s215] sm:$0xff]
        %245 = vst [vmem:[#allocation1] ss:$2 sm:$0xff] %v243
        %v246 = vld.sshfl [vmem:[#allocation1] sm:$0xff pattern:$0x75316420]
        %v247 = vld.sshfl [vmem:[#allocation1 + $0x8] sm:$0xff pattern:$0x75316420]
        %vm250 = vcmask 1043456
        %v251 = vsel %vm250, %v246, 0.0
        %v252 = vsel %vm250, %v247, 0.0
        %v253 = vadd.f32 %v251, %v252
        %254 = vadd.xlane.f32.xlu0 %v253
        %v255 = vpop.xlane.xlu0 %254
        %v256 = vmul.f32 %v255, 0.00390625
        %v257 = vld [vmem:[%s1] sm:$0xf]
        %v258 = vmul.f32 %v257, %v256
        %vm259 = vcmask 11264
        %v260 = vsel %vm259, %v258, 0.0
        %v261 = vrot.slane %v260, 4
        %v262 = vadd.f32 %v260, %v261
        %v263 = vrot.slane %v262, 2
        %v264 = vadd.f32 %v262, %v263
        %v265 = vrot.slane %v264, 1
        %v266 = vadd.f32 %v264, %v265
        %v267 = vld [vmem:[%s2] sm:$0x1]
        %v268 = vadd.f32 %v266, %v267
        %vm269 = vcmask 8192
        %v270 = vsel %vm269, %v268, -inf
        %271 = vmax.xlane.f32.xlu0 %v270
        %v272 = vpop.xlane.xlu0 %271
        %v273 = vsub.f32 %v268, %v272
        %v274 = vmul.f32 %v273, 1.442695
        %v275 = vpow.pop %v274
        %v276 = vsel %vm269, %v275, 0.0
        %277 = vadd.xlane.f32.xlu0 %v276
        %v278 = vpop.xlane.xlu0 %277
        %v279 = vrcp.pop %v278
        %v280 = vmul.f32 %v278, %v279
        %v281 = vsub.f32 1.0, %v280
        %v282 = vmul.f32 %v279, %v281
        %v283 = vadd.f32 %v279, %v282
        %vm284 = vweird.f32 %v278
        %vm285 = vweird.f32 %v279
        %vm286 = vmor %vm284, %vm285
        %v287 = vsel %vm286, %v279, %v283
        %v288 = vand.u32 2147483647, %v278
        %vm289 = vcmp.eq.f32.partialorder %v288, 8.507059e+37
        %v290 = vand.u32 %v278, 2147483648
        %v291 = vor.u32 1.1754944e-38, %v290
        %v292 = vsel %vm289, %v291, %v287
        %v293 = vmul.f32 %v275, %v292
        %v294 = vld [vmem:[%s3] sm:$0xf]
        %v295 = vperm.slane %v293, 0
        %v296 = vmul.f32 %v294, %v295
        %v297 = vsel %vm259, %v296, 0.0
        %298 = vadd.xlane.f32.xlu0 %v297
        %v299 = vpop.xlane.xlu0 %298
        %v300 = vld [vmem:[%s4] sm:$0x1]
        %v301 = vmul.f32 %v300, %v293
        %v302 = vsel %vm269, %v301, 0.0
        %303 = vadd.xlane.f32.xlu0 %v302
        %v304 = vpop.xlane.xlu0 %303
        %v307 = vunpack.c.l.s4 839922192
        %v308 = vunpack.c.0.s8 %v307
        %v309 = vperm.slane %v299, %v308
        %v311 = vmul.f32 %v243, %v309
        %313 = vst [vmem:[#allocation1] ss:$2 sm:$0xff] %v311
        %v314 = vld.sshfl [vmem:[#allocation1] sm:$0xff pattern:$0x75316420]
        %v315 = vld.sshfl [vmem:[#allocation1 + $0x8] sm:$0xff pattern:$0x75316420]
        %v318 = vsel %vm250, %v314, 0.0
        %v319 = vrot.slane %v318, 4
        %v320 = vadd.f32 %v318, %v319
        %v321 = vrot.slane %v320, 2
        %v322 = vadd.f32 %v320, %v321
        %v323 = vrot.slane %v322, 1
        %v324 = vadd.f32 %v322, %v323
        %v325 = vsel %vm250, %v315, 0.0
        %v326 = vrot.slane %v325, 4
        %v327 = vadd.f32 %v325, %v326
        %v328 = vrot.slane %v327, 2
        %v329 = vadd.f32 %v327, %v328
        %v330 = vrot.slane %v329, 1
        %v331 = vadd.f32 %v329, %v330
        %v332 = vadd.f32 %v324, %v304
        %v333 = vadd.f32 %v331, %v304
        %v334 = vxor.u32 %v332, 2147483648
        %v335 = vxor.u32 %v333, 2147483648
        %v336 = vmul.f32 %v334, 1.442695
        %v337 = vpow.pop %v336
        %v338 = vmul.f32 %v335, 1.442695
        %v339 = vpow.pop %v338
        %v340 = vadd.f32 %v337, 1.0
        %v341 = vadd.f32 %v339, 1.0
        %v342 = vrcp.pop %v340
        %v343 = vmul.f32 %v340, %v342
        %v344 = vsub.f32 1.0, %v343
        %v345 = vmul.f32 %v342, %v344
        %v346 = vadd.f32 %v342, %v345
        %vm347 = vweird.f32 %v340
        %vm348 = vweird.f32 %v342
        %vm349 = vmor %vm347, %vm348
        %v350 = vsel %vm349, %v342, %v346
        %v351 = vand.u32 2147483647, %v340
        %vm352 = vcmp.eq.f32.partialorder %v351, 8.507059e+37
        %v353 = vand.u32 %v340, 2147483648
        %v354 = vor.u32 1.1754944e-38, %v353
        %v355 = vsel %vm352, %v354, %v350
        %v356 = vmul.f32 1.0, %v355
        %v357 = vrcp.pop %v341
        %v358 = vmul.f32 %v341, %v357
        %v359 = vsub.f32 1.0, %v358
        %v360 = vmul.f32 %v357, %v359
        %v361 = vadd.f32 %v357, %v360
        %vm362 = vweird.f32 %v341
        %vm363 = vweird.f32 %v357
        %vm364 = vmor %vm362, %vm363
        %v365 = vsel %vm364, %v357, %v361
        %v366 = vand.u32 2147483647, %v341
        %vm367 = vcmp.eq.f32.partialorder %v366, 8.507059e+37
        %v368 = vand.u32 %v341, 2147483648
        %v369 = vor.u32 1.1754944e-38, %v368
        %v370 = vsel %vm367, %v369, %v365
        %v371 = vmul.f32 1.0, %v370
        %v372 = vperm.slane %v356, 0
        %v373 = vperm.slane %v371, 0
        %v376 = vrot.slane %v373, 4
        %v377 = vsel %vm250, %v372, %v376
        %v379 = vmul.f32 %v243, %v377
        %380 = vst [vmem:[%s242] sm:$0xff] %v379
        %s381 = sand.u32 %s140, 1
        %s382 = scalar_lea.sflag [#allocation4], %s381
        %s383 = sand.u32 %s140, 1
        %s384 = smul.addr %s383, 8
        %s385 = scalar_lea.vmem [#allocation5], %s384
        // Predicated region
        $region45: #{tpu_custom_call.1} parent=39 // pred_check
          %p386 = pneg %p150
        $region46: #{tpu_custom_call.1} parent=39 // pred_check_branch
          %388 = sbr.rel (%p386) target = $region48
        $region47: #{tpu_custom_call.1} parent=39 // pred_region
          %390 = vsyncadd %s382, 0
          %s391 = smul.addr %s22, 2
          %s392 = smul.addr %s391, 4
          %s393 = scalar_lea.hbm %s5, %s392
          %s395 = sshll.u32 %s385, 4
          %s396 = int_to_ptr.vmem [resolvable:$true] %s395
          %s397 = sshll.u32 %s393, 4
          %s398 = int_to_ptr.hbm [resolvable:$true] %s397
          %400 = dma.vmem_to_hbm [thread:$0]  %s396, 128, %s398, %s382
        $region48: #{tpu_custom_call.1} parent=39 // pred_fallthru
          _
      $region40: #{tpu_custom_call.1} parent=5 // pred_fallthru
        _
      %p401 = scmp.le.s32.totalorder 2, %s17
      // Predicated region
      $region49: #{tpu_custom_call.1} parent=5 // pred_check
        %p402 = pneg %p401
      $region50: #{tpu_custom_call.1} parent=5 // pred_check_branch
        %404 = sbr.rel (%p402) target = $region52
      $region51: #{tpu_custom_call.1} parent=5 // pred_region
        %s405 = ssub.s32 %s17, 2
        // Predicated region
        $region53: #{tpu_custom_call.1} parent=51 // pred_check
          %p406 = pneg %p156
        $region54: #{tpu_custom_call.1} parent=51 // pred_check_branch
          %408 = sbr.rel (%p406) target = $region56
        $region55: #{tpu_custom_call.1} parent=51 // pred_region
          %s409 = sand.u32 %s141, 1
          %s410 = scalar_lea.sflag [#allocation4], %s409
          %s411 = sand.u32 %s141, 1
          %s412 = smul.addr %s411, 8
          %s413 = scalar_lea.vmem [#allocation5], %s412
          %415 = dma.done %s410, 128
        $region56: #{tpu_custom_call.1} parent=51 // pred_fallthru
          _
      $region52: #{tpu_custom_call.1} parent=5 // pred_fallthru
        _
    $region6: #{tpu_custom_call.1} parent=1 // loop_footer
      %s21 = sadd.s32 1, %s17
    $region7: #{tpu_custom_call.1} parent=1 // loop_footer_branch
      %16 = sbr.rel target = $region3
    $region8: #{tpu_custom_call.1} parent=1 // loop_exit
      _
    %416 = vsyncpa [#allocation3], 1
    %s417 = scalar_lea.sflag [#allocation3], 1
    %418 = vsyncpa %s417, 1
    %419 = vsyncpa [#allocation4], 1
    %s420 = scalar_lea.sflag [#allocation4], 1
    %421 = vsyncpa %s420, 1

</llo_original>
